<compile_context>
chip_gen: v7x
topology: tpu7x:2x2x1
jax: 0.10.0
libtpu: 0.0.40
codegen_flags: <defaults>
</compile_context>

<pallas_src>
import math

import jax
import jax.numpy as jnp
from jax import lax
from jax.experimental import pallas as pl
from jax.experimental.pallas import tpu as pltpu

N_ACTIONS = 4
STATE_SIZE = 8
H1 = 64
H2 = 32


def _round_up(n, m):
    return ((n + m - 1) // m) * m


def _make_dqn_kernel(chunk, n_chunks, unroll):
    """Kernel factory: chunk / n_chunks are trace-time constants."""

    def kernel(xT_ref, w1_ref, b1_ref, w2_ref, b2_ref, w3_ref, b3_ref, out_ref):
        # Hoist the tiny weights/biases out of the chunk loop (VMEM-resident,
        # loaded once per grid step).
        w1 = w1_ref[...]            # [H1, S ] bf16
        w2 = w2_ref[...]            # [H2, H1] bf16
        w3 = w3_ref[...]            # [A,  H2] bf16
        b1 = b1_ref[...]            # [H1, 1 ] f32
        b2 = b2_ref[...]            # [H2, 1 ] f32
        b3 = b3_ref[...]            # [A,  1 ] f32

        def body(c, carry):
            # Lane-aligned chunk of the batch tile (chunk is a multiple of 128).
            off = pl.multiple_of(c * chunk, chunk)
            xT = xT_ref[:, pl.ds(off, chunk)]                                  # [S, C] bf16

            # fc1 + ReLU (f32 accumulation on the MXU, bias broadcast over lanes)
            h1 = jnp.dot(w1, xT, preferred_element_type=jnp.float32)           # [H1, C]
            h1 = jnp.maximum(h1 + b1, 0.0).astype(jnp.bfloat16)

            # fc2 + ReLU
            h2 = jnp.dot(w2, h1, preferred_element_type=jnp.float32)           # [H2, C]
            h2 = jnp.maximum(h2 + b2, 0.0).astype(jnp.bfloat16)

            # fc3 (no activation), lane-dense store
            q = jnp.dot(w3, h2, preferred_element_type=jnp.float32) + b3       # [A, C]
            out_ref[:, pl.ds(off, chunk)] = q.astype(out_ref.dtype)
            return carry

        lax.fori_loop(0, n_chunks, body, 0, unroll=unroll)

    return kernel


def dqn_forward(x, params, *, block_b=8192, lane_chunk=512, x_transposed=False,
                out_dtype=jnp.float32):
    """DQN forward pass.

    x: [B, STATE_SIZE] (or [STATE_SIZE, B] if x_transposed=True), any float dtype.
    Returns [B, N_ACTIONS] in `out_dtype` (f32 by default; bf16 halves output
    HBM writes if the consumer tolerates it).
    """
    w1, b1, w2, b2, w3, b3 = params

    if x_transposed:
        # Fast path: activations already feature-major -> no wrapper HBM pass.
        S, B = x.shape
        xT = jnp.asarray(x).astype(jnp.bfloat16)
    else:
        B, S = x.shape
        # Single fused transpose + bf16 downcast pass (read f32, write bf16).
        xT = jnp.asarray(x).T.astype(jnp.bfloat16)
    assert S == STATE_SIZE, f"expected {STATE_SIZE} features, got {S}"

    # Batch tile: lane-dense (multiple of 128), large enough to amortize the
    # fixed per-grid-step overhead, but capped near B/2 so megacore parts get
    # >=2 grid steps to shard across TensorCores.
    block_b = _round_up(max(block_b, 128), 128)
    half_b = _round_up(pl.cdiv(B, 2), 128)
    TB = max(128, min(block_b, half_b))

    # Inner compute chunk: multiple of 128 that divides TB (keeps f32
    # intermediates ~vreg-file sized instead of materializing 64*TB floats).
    lane_chunk = _round_up(max(lane_chunk, 128), 128)
    chunk = math.gcd(TB, lane_chunk)
    n_chunks = TB // chunk

    # bf16 MXU operands (f32 accumulation inside the kernel); biases stay f32.
    w1b = w1.astype(jnp.bfloat16)
    w2b = w2.astype(jnp.bfloat16)
    w3b = w3.astype(jnp.bfloat16)

    grid = (pl.cdiv(B, TB),)  # no pad copy; Pallas masks the ragged last block
    resident = lambda shape: pl.BlockSpec(shape, lambda i: (0, 0))

    qT = pl.pallas_call(
        _make_dqn_kernel(chunk, n_chunks, unroll=min(n_chunks, 8)),
        out_shape=jax.ShapeDtypeStruct((N_ACTIONS, B), out_dtype),
        grid=grid,
        in_specs=[
            pl.BlockSpec((STATE_SIZE, TB), lambda i: (0, i)),   # x^T tile (pipelined)
            resident(w1b.shape), resident(b1.shape),            # weights/biases: DMA once
            resident(w2b.shape), resident(b2.shape),
            resident(w3b.shape), resident(b3.shape),
        ],
        out_specs=pl.BlockSpec((N_ACTIONS, TB), lambda i: (0, i)),
        compiler_params=pltpu.CompilerParams(
            dimension_semantics=("parallel",),
        ),
    )(xT, w1b, b1, w2b, b2, w3b, b3)

    return qT.T  # [B, N_ACTIONS]


def init_params(key):
    """nn.Linear-style init: U(-1/sqrt(fan_in), 1/sqrt(fan_in)).

    Weights in PyTorch layout [out_features, in_features]; biases kept as f32
    columns [out_features, 1] so they broadcast over the lane (batch) axis.
    """
    def linear(key, fan_in, fan_out):
        kw, kb = jax.random.split(key)
        bound = 1.0 / math.sqrt(fan_in)
        w = jax.random.uniform(kw, (fan_out, fan_in), jnp.float32, -bound, bound)
        b = jax.random.uniform(kb, (fan_out,), jnp.float32, -bound, bound)
        return w, b.reshape(fan_out, 1)

    k1, k2, k3 = jax.random.split(key, 3)
    w1, b1 = linear(k1, STATE_SIZE, H1)
    w2, b2 = linear(k2, H1, H2)
    w3, b3 = linear(k3, H2, N_ACTIONS)
    return (w1, b1, w2, b2, w3, b3)


def dqn_reference(x, params):
    """Pure-JAX f32 reference (PyTorch forward semantics)."""
    w1, b1, w2, b2, w3, b3 = params
    h1 = jnp.maximum(x @ w1.T + b1.T, 0.0)
    h2 = jnp.maximum(h1 @ w2.T + b2.T, 0.0)
    return h2 @ w3.T + b3.T


if __name__ == "__main__":
    key = jax.random.PRNGKey(0)
    k_params, k1, k2, k3 = jax.random.split(key, 4)

    params = init_params(k_params)
    tol = dict(atol=2e-2, rtol=2e-2)  # bf16 operands vs f32 reference

    # (1) Action-selection-style batch: single 128-lane tile, single chunk.
    x_small = jax.random.normal(k1, (2, STATE_SIZE), jnp.float32)
    out_small = jax.block_until_ready(dqn_forward(x_small, params))
    assert out_small.shape == (2, N_ACTIONS)
    assert jnp.allclose(out_small, dqn_reference(x_small, params), **tol), "mismatch (small)"

    # (2) Multi-step grid with a ragged last block (384 -> TB=256, grid=2,
    #     last block half-valid): exercises padless masking + resident weights.
    x_mid = jax.random.normal(k2, (384, STATE_SIZE), jnp.float32)
    out_mid = jax.block_until_ready(dqn_forward(x_mid, params))
    assert out_mid.shape == (384, N_ACTIONS)
    assert jnp.allclose(out_mid, dqn_reference(x_mid, params), **tol), "mismatch (ragged)"

    # (3) Exercises the inner lane-chunk loop (TB=768 -> 3 chunks of 256).
    x_big = jax.random.normal(k3, (1536, STATE_SIZE), jnp.float32)
    out_big = jax.block_until_ready(
        dqn_forward(x_big, params, block_b=1024, lane_chunk=256))
    assert out_big.shape == (1536, N_ACTIONS)
    assert jnp.allclose(out_big, dqn_reference(x_big, params), **tol), "mismatch (chunked)"

    # (4) Feature-major fast path: caller supplies x^T, no wrapper transpose pass.
    out_t = jax.block_until_ready(
        dqn_forward(x_big.T, params, x_transposed=True, block_b=512))
    assert out_t.shape == (1536, N_ACTIONS)
    assert jnp.allclose(out_t, dqn_reference(x_big, params), **tol), "mismatch (transposed)"

    print("KERNEL_OK")
</pallas_src>

<mosaic_0001>
module attributes {stable_mosaic.version = 11 : i64} {
  func.func @kernel(%arg0: i32, %arg1: memref<8x128xbf16, #tpu.memory_space<vmem>>, %arg2: memref<64x8xbf16, #tpu.memory_space<vmem>>, %arg3: memref<64x1xf32, #tpu.memory_space<vmem>>, %arg4: memref<32x64xbf16, #tpu.memory_space<vmem>>, %arg5: memref<32x1xf32, #tpu.memory_space<vmem>>, %arg6: memref<4x32xbf16, #tpu.memory_space<vmem>>, %arg7: memref<4x1xf32, #tpu.memory_space<vmem>>, %arg8: memref<4x128xf32, #tpu.memory_space<vmem>>) attributes {dimension_semantics = [#tpu.dimension_semantics<parallel>], iteration_bounds = array<i64: 1>, scalar_prefetch = 0 : i64, scratch_operands = 0 : i64, tpu.core_type = #tpu.core_type<tc>, window_params = [{transform_indices = @transform_0, window_bounds = array<i64: 8, 128>}, {pipeline_mode = #tpu.pipeline_mode<synchronous>, transform_indices = @transform_1, window_bounds = array<i64: 64, 8>}, {pipeline_mode = #tpu.pipeline_mode<synchronous>, transform_indices = @transform_2, window_bounds = array<i64: 64, 1>}, {pipeline_mode = #tpu.pipeline_mode<synchronous>, transform_indices = @transform_3, window_bounds = array<i64: 32, 64>}, {pipeline_mode = #tpu.pipeline_mode<synchronous>, transform_indices = @transform_4, window_bounds = array<i64: 32, 1>}, {pipeline_mode = #tpu.pipeline_mode<synchronous>, transform_indices = @transform_5, window_bounds = array<i64: 4, 32>}, {pipeline_mode = #tpu.pipeline_mode<synchronous>, transform_indices = @transform_6, window_bounds = array<i64: 4, 1>}, {transform_indices = @transform_7, window_bounds = array<i64: 4, 128>}]} {
    %c0 = arith.constant 0 : index
    %c0_0 = arith.constant 0 : index
    %0 = vector.load %arg2[%c0, %c0_0] : memref<64x8xbf16, #tpu.memory_space<vmem>>, vector<64x8xbf16>
    %c0_1 = arith.constant 0 : index
    %c0_2 = arith.constant 0 : index
    %1 = vector.load %arg4[%c0_1, %c0_2] : memref<32x64xbf16, #tpu.memory_space<vmem>>, vector<32x64xbf16>
    %c0_3 = arith.constant 0 : index
    %c0_4 = arith.constant 0 : index
    %2 = vector.load %arg6[%c0_3, %c0_4] : memref<4x32xbf16, #tpu.memory_space<vmem>>, vector<4x32xbf16>
    %c0_5 = arith.constant 0 : index
    %c0_6 = arith.constant 0 : index
    %3 = vector.load %arg3[%c0_5, %c0_6] : memref<64x1xf32, #tpu.memory_space<vmem>>, vector<64x1xf32>
    %c0_7 = arith.constant 0 : index
    %c0_8 = arith.constant 0 : index
    %4 = vector.load %arg5[%c0_7, %c0_8] : memref<32x1xf32, #tpu.memory_space<vmem>>, vector<32x1xf32>
    %c0_9 = arith.constant 0 : index
    %c0_10 = arith.constant 0 : index
    %5 = vector.load %arg7[%c0_9, %c0_10] : memref<4x1xf32, #tpu.memory_space<vmem>>, vector<4x1xf32>
    %c0_i32 = arith.constant 0 : i32
    %c128_i32 = arith.constant 128 : i32
    %6 = arith.muli %c0_i32, %c128_i32 : i32
    %7 = tpu.assume_multiple %6, 128 : i32
    %c0_11 = arith.constant 0 : index
    %8 = arith.index_cast %7 : i32 to index
    %9 = vector.load %arg1[%c0_11, %8] : memref<8x128xbf16, #tpu.memory_space<vmem>>, vector<8x128xbf16>
    %cst = arith.constant dense<0.000000e+00> : vector<64x128xf32>
    %10 = tpu.matmul %0, %9, %cst {dimension_numbers = #tpu.dot_dimension_numbers<[1], [0], [0], [1], [0, 0, 1, 1], [], []>} : vector<64x8xbf16>, vector<8x128xbf16>, vector<64x128xf32> -> vector<64x128xf32>
    %11 = vector.broadcast %3 : vector<64x1xf32> to vector<64x128xf32>
    %12 = arith.addf %10, %11 : vector<64x128xf32>
    %cst_12 = arith.constant 0.000000e+00 : f32
    %13 = vector.broadcast %cst_12 : f32 to vector<64x128xf32>
    %14 = arith.maximumf %12, %13 : vector<64x128xf32>
    %15 = arith.truncf %14 : vector<64x128xf32> to vector<64x128xbf16>
    %cst_13 = arith.constant dense<0.000000e+00> : vector<32x128xf32>
    %16 = tpu.matmul %1, %15, %cst_13 {dimension_numbers = #tpu.dot_dimension_numbers<[1], [0], [0], [1], [0, 0, 1, 1], [], []>} : vector<32x64xbf16>, vector<64x128xbf16>, vector<32x128xf32> -> vector<32x128xf32>
    %17 = vector.broadcast %4 : vector<32x1xf32> to vector<32x128xf32>
    %18 = arith.addf %16, %17 : vector<32x128xf32>
    %cst_14 = arith.constant 0.000000e+00 : f32
    %19 = vector.broadcast %cst_14 : f32 to vector<32x128xf32>
    %20 = arith.maximumf %18, %19 : vector<32x128xf32>
    %21 = arith.truncf %20 : vector<32x128xf32> to vector<32x128xbf16>
    %cst_15 = arith.constant dense<0.000000e+00> : vector<4x128xf32>
    %22 = tpu.matmul %2, %21, %cst_15 {dimension_numbers = #tpu.dot_dimension_numbers<[1], [0], [0], [1], [0, 0, 1, 1], [], []>} : vector<4x32xbf16>, vector<32x128xbf16>, vector<4x128xf32> -> vector<4x128xf32>
    %23 = vector.broadcast %5 : vector<4x1xf32> to vector<4x128xf32>
    %24 = arith.addf %22, %23 : vector<4x128xf32>
    %c0_16 = arith.constant 0 : index
    %25 = arith.index_cast %7 : i32 to index
    %26 = vector.load %arg8[%c0_16, %25] : memref<4x128xf32, #tpu.memory_space<vmem>>, vector<4x128xf32>
    tpu.vector_store %arg8[%c0_16, %25], %24 {strides = array<i32>} : memref<4x128xf32, #tpu.memory_space<vmem>>, vector<4x128xf32>,
    %c1_i32 = arith.constant 1 : i32
    return
  }
  func.func @transform_0(%arg0: i32) -> (i32, i32) {
    %c0_i32 = arith.constant 0 : i32
    %c0_i32_0 = arith.constant 0 : i32
    return %c0_i32, %arg0 : i32, i32
  }
  func.func @transform_1(%arg0: i32) -> (i32, i32) {
    %c0_i32 = arith.constant 0 : i32
    %c0_i32_0 = arith.constant 0 : i32
    %c0_i32_1 = arith.constant 0 : i32
    return %c0_i32, %c0_i32_0 : i32, i32
  }
  func.func @transform_2(%arg0: i32) -> (i32, i32) {
    %c0_i32 = arith.constant 0 : i32
    %c0_i32_0 = arith.constant 0 : i32
    %c0_i32_1 = arith.constant 0 : i32
    return %c0_i32, %c0_i32_0 : i32, i32
  }
  func.func @transform_3(%arg0: i32) -> (i32, i32) {
    %c0_i32 = arith.constant 0 : i32
    %c0_i32_0 = arith.constant 0 : i32
    %c0_i32_1 = arith.constant 0 : i32
    return %c0_i32, %c0_i32_0 : i32, i32
  }
  func.func @transform_4(%arg0: i32) -> (i32, i32) {
    %c0_i32 = arith.constant 0 : i32
    %c0_i32_0 = arith.constant 0 : i32
    %c0_i32_1 = arith.constant 0 : i32
    return %c0_i32, %c0_i32_0 : i32, i32
  }
  func.func @transform_5(%arg0: i32) -> (i32, i32) {
    %c0_i32 = arith.constant 0 : i32
    %c0_i32_0 = arith.constant 0 : i32
    %c0_i32_1 = arith.constant 0 : i32
    return %c0_i32, %c0_i32_0 : i32, i32
  }
  func.func @transform_6(%arg0: i32) -> (i32, i32) {
    %c0_i32 = arith.constant 0 : i32
    %c0_i32_0 = arith.constant 0 : i32
    %c0_i32_1 = arith.constant 0 : i32
    return %c0_i32, %c0_i32_0 : i32, i32
  }
  func.func @transform_7(%arg0: i32) -> (i32, i32) {
    %c0_i32 = arith.constant 0 : i32
    %c0_i32_0 = arith.constant 0 : i32
    return %c0_i32, %arg0 : i32, i32
  }
}

</mosaic_0001>

<llo_original>
// kernel: tpu_custom_call.1
$region0: #{tpu_custom_call.1}
  #allocation0 [shape = 'u32[]', space=smem, size = 0x4, offset = 0x4, fixed_abs, tag = 'smem constant byte address 0x4 - core index']
  #allocation1 [shape = 'u32[144,128]{1,0:T(1,128)}', space=vmem, size = 0x12000, scoped, tag = 'internal scratch']
  %s0 = inlined_call_operand.vmem [shape: bf16[8,2], index: 0, kind: input, shape index: {}]
  %s1 = inlined_call_operand.vmem [shape: bf16[64,8], index: 1, kind: input, shape index: {}]
  %s2 = inlined_call_operand.vmem [shape: f32[64,1], index: 2, kind: input, shape index: {}]
  %s3 = inlined_call_operand.vmem [shape: bf16[32,64], index: 3, kind: input, shape index: {}]
  %s4 = inlined_call_operand.vmem [shape: f32[32,1], index: 4, kind: input, shape index: {}]
  %s5 = inlined_call_operand.vmem [shape: bf16[4,32], index: 5, kind: input, shape index: {}]
  %s6 = inlined_call_operand.vmem [shape: f32[4,1], index: 6, kind: input, shape index: {}]
  %s7 = inlined_call_operand.vmem [shape: f32[4,2], index: 7, kind: output, shape index: {}]
  %s8 = sld [smem:[#allocation0]]
  $region38: #{tpu_custom_call.1} parent=0
    _
  %s10 = ssub.s32 1, %s8
  %s11 = scalar_select 0, %s10, %s8
  // Predicated region
  $region2: #{tpu_custom_call.1} parent=0 // pred_check
    _
  $region3: #{tpu_custom_call.1} parent=0 // pred_check_branch
    %13 = sbr.rel (0) target = $region5
  $region4: #{tpu_custom_call.1} parent=0 // pred_region
    _
  $region5: #{tpu_custom_call.1} parent=0 // pred_fallthru
    _
  // Predicated region
  $region6: #{tpu_custom_call.1} parent=0 // pred_check
    _
  $region7: #{tpu_custom_call.1} parent=0 // pred_check_branch
    %15 = sbr.rel (0) target = $region9
  $region8: #{tpu_custom_call.1} parent=0 // pred_region
    _
  $region9: #{tpu_custom_call.1} parent=0 // pred_fallthru
    _
  // Predicated region
  $region10: #{tpu_custom_call.1} parent=0 // pred_check
    _
  $region11: #{tpu_custom_call.1} parent=0 // pred_check_branch
    %17 = sbr.rel (0) target = $region13
  $region12: #{tpu_custom_call.1} parent=0 // pred_region
    _
  $region13: #{tpu_custom_call.1} parent=0 // pred_fallthru
    _
  // Predicated region
  $region14: #{tpu_custom_call.1} parent=0 // pred_check
    _
  $region15: #{tpu_custom_call.1} parent=0 // pred_check_branch
    %19 = sbr.rel (0) target = $region17
  $region16: #{tpu_custom_call.1} parent=0 // pred_region
    _
  $region17: #{tpu_custom_call.1} parent=0 // pred_fallthru
    _
  // Predicated region
  $region18: #{tpu_custom_call.1} parent=0 // pred_check
    _
  $region19: #{tpu_custom_call.1} parent=0 // pred_check_branch
    %21 = sbr.rel (0) target = $region21
  $region20: #{tpu_custom_call.1} parent=0 // pred_region
    _
  $region21: #{tpu_custom_call.1} parent=0 // pred_fallthru
    _
  // Predicated region
  $region22: #{tpu_custom_call.1} parent=0 // pred_check
    _
  $region23: #{tpu_custom_call.1} parent=0 // pred_check_branch
    %23 = sbr.rel (0) target = $region25
  $region24: #{tpu_custom_call.1} parent=0 // pred_region
    _
  $region25: #{tpu_custom_call.1} parent=0 // pred_fallthru
    _
  // Predicated region
  $region26: #{tpu_custom_call.1} parent=0 // pred_check
    _
  $region27: #{tpu_custom_call.1} parent=0 // pred_check_branch
    %25 = sbr.rel (0) target = $region29
  $region28: #{tpu_custom_call.1} parent=0 // pred_region
    _
  $region29: #{tpu_custom_call.1} parent=0 // pred_fallthru
    _
  %v27 = vld [vmem:[%s1] sm:$0xf]
  %v28 = vld [vmem:[%s1 + $0x4] sm:$0xf]
  %v29 = vld [vmem:[%s1 + $0x8] sm:$0xf]
  %v30 = vld [vmem:[%s1 + $0xc] sm:$0xf]
  %v31 = vld [vmem:[%s1 + $0x10] sm:$0xf]
  %v32 = vld [vmem:[%s1 + $0x14] sm:$0xf]
  %v33 = vld [vmem:[%s1 + $0x18] sm:$0xf]
  %v34 = vld [vmem:[%s1 + $0x1c] sm:$0xf]
  %v35 = vld [vmem:[%s3] sm:$0xf]
  %v36 = vld [vmem:[%s3 + $0x4] sm:$0xf]
  %v37 = vld [vmem:[%s3 + $0x8] sm:$0xf]
  %v38 = vld [vmem:[%s3 + $0xc] sm:$0xf]
  %v39 = vld [vmem:[%s5] sm:$0x3]
  %v40 = vld [vmem:[%s2] sm:$0xff]
  %v41 = vld [vmem:[%s2 + $0x8] sm:$0xff]
  %v42 = vld [vmem:[%s2 + $0x10] sm:$0xff]
  %v43 = vld [vmem:[%s2 + $0x18] sm:$0xff]
  %v44 = vld [vmem:[%s2 + $0x20] sm:$0xff]
  %v45 = vld [vmem:[%s2 + $0x28] sm:$0xff]
  %v46 = vld [vmem:[%s2 + $0x30] sm:$0xff]
  %v47 = vld [vmem:[%s2 + $0x38] sm:$0xff]
  %v48 = vld [vmem:[%s4] sm:$0xff]
  %v49 = vld [vmem:[%s4 + $0x8] sm:$0xff]
  %v50 = vld [vmem:[%s4 + $0x10] sm:$0xff]
  %v51 = vld [vmem:[%s4 + $0x18] sm:$0xff]
  %v52 = vld [vmem:[%s6] sm:$0xf]
  %v53 = vld [vmem:[%s0] sm:$0xf]
  %55 = vset.pattern.permute.xlu0 0
  %56 = vperm.xlu0 %55, %v40
  %v57 = vpop.permute.xlu0 %56
  %60 = vset.pattern.permute.xlu0 0
  %61 = vperm.xlu0 %60, %v41
  %v62 = vpop.permute.xlu0 %61
  %65 = vset.pattern.permute.xlu0 0
  %66 = vperm.xlu0 %65, %v42
  %v67 = vpop.permute.xlu0 %66
  %70 = vset.pattern.permute.xlu0 0
  %71 = vperm.xlu0 %70, %v43
  %v72 = vpop.permute.xlu0 %71
  %75 = vset.pattern.permute.xlu0 0
  %76 = vperm.xlu0 %75, %v44
  %v77 = vpop.permute.xlu0 %76
  %80 = vset.pattern.permute.xlu0 0
  %81 = vperm.xlu0 %80, %v45
  %v82 = vpop.permute.xlu0 %81
  %85 = vset.pattern.permute.xlu0 0
  %86 = vperm.xlu0 %85, %v46
  %v87 = vpop.permute.xlu0 %86
  %90 = vset.pattern.permute.xlu0 0
  %91 = vperm.xlu0 %90, %v47
  %v92 = vpop.permute.xlu0 %91
  %v102 = vunpack.c.l.b16 %v27
  %v103 = vunpack.c.l.b16 %v28
  %v104 = vunpack.c.l.b16 %v29
  %v105 = vunpack.c.l.b16 %v30
  %v106 = vunpack.c.l.b16 %v31
  %v107 = vunpack.c.l.b16 %v32
  %v108 = vunpack.c.l.b16 %v33
  %v109 = vunpack.c.l.b16 %v34
  %v110 = vpack.c.b16 %v103, %v102
  %v111 = vpack.c.b16 %v105, %v104
  %v112 = vpack.c.b16 %v107, %v106
  %v113 = vpack.c.b16 %v109, %v108
  %vm114 = vcmask 64512
  %v116 = vsel %vm114, %v110, 0
  %v119 = vsel %vm114, %v111, 0
  %v122 = vsel %vm114, %v112, 0
  %v125 = vsel %vm114, %v113, 0
  %vm127 = vcmask 1043456
  %v129 = vsel %vm127, %v53, 0
  %131 = vmatprep.subr.bf16.mxu0 0
  %132 = vmatpush1.bf16.msra.mxu0 %v129
  %133 = vmatprep.subr.bf16.mxu0 0
  %134 = vmatpush1.bf16.msra.mxu0 0
  %135 = vmatprep.subr.bf16.mxu0 0
  %136 = vmatpush1.bf16.msra.mxu0 0
  %137 = vmatprep.subr.bf16.mxu0 0
  %138 = vmatpush1.bf16.msra.mxu0 0
  %139 = vmatprep.subr.bf16.mxu0 0
  %140 = vmatpush1.bf16.msra.mxu0 0
  %141 = vmatprep.subr.bf16.mxu0 0
  %142 = vmatpush1.bf16.msra.mxu0 0
  %143 = vmatprep.subr.bf16.mxu0 0
  %144 = vmatpush1.bf16.msra.mxu0 0
  %145 = vmatprep.subr.bf16.mxu0 0
  %146 = vmatpush1.bf16.msra.mxu0 0
  %147 = vmatprep.subr.bf16.mxu0 0
  %148 = vmatpush1.bf16.msra.mxu0 0
  %149 = vmatprep.subr.bf16.mxu0 0
  %150 = vmatpush1.bf16.msra.mxu0 0
  %151 = vmatprep.subr.bf16.mxu0 0
  %152 = vmatpush1.bf16.msra.mxu0 0
  %153 = vmatprep.subr.bf16.mxu0 0
  %154 = vmatpush1.bf16.msra.mxu0 0
  %155 = vmatprep.subr.bf16.mxu0 0
  %156 = vmatpush1.bf16.msra.mxu0 0
  %157 = vmatprep.subr.bf16.mxu0 0
  %158 = vmatpush1.bf16.msra.mxu0 0
  %159 = vmatprep.subr.bf16.mxu0 0
  %160 = vmatpush1.bf16.msra.mxu0 0
  %161 = vmatprep.subr.bf16.mxu0 0
  %162 = vmatpush1.bf16.msra.mxu0 0
  %163 = vmatprep.mubr.bf16.mxu0 0
  %164 = vmatmul.mubr.bf16.gmra.mrb[0].mxu0 %v116
  %v165 = vpop.f32.mrb[0].mxu0
  %v166 = vadd.f32 %v57, %v165
  %v167 = vpop.f32.mrb[0].mxu0
  %v168 = vpop.f32.mrb[0].mxu0
  %v169 = vadd.f32 %v62, %v168
  %v170 = vpop.f32.mrb[0].mxu0
  %171 = vmatprep.mubr.bf16.mxu0 0
  %172 = vmatmul.mubr.bf16.gmra.mrb[0].mxu0 %v119
  %v173 = vpop.f32.mrb[0].mxu0
  %v174 = vadd.f32 %v67, %v173
  %v175 = vpop.f32.mrb[0].mxu0
  %v176 = vpop.f32.mrb[0].mxu0
  %v177 = vadd.f32 %v72, %v176
  %v178 = vpop.f32.mrb[0].mxu0
  %179 = vmatprep.mubr.bf16.mxu0 0
  %180 = vmatmul.mubr.bf16.gmra.mrb[0].mxu0 %v122
  %v181 = vpop.f32.mrb[0].mxu0
  %v182 = vadd.f32 %v77, %v181
  %v183 = vpop.f32.mrb[0].mxu0
  %v184 = vpop.f32.mrb[0].mxu0
  %v185 = vadd.f32 %v82, %v184
  %v186 = vpop.f32.mrb[0].mxu0
  %187 = vmatprep.mubr.bf16.mxu0 0
  %188 = vmatmul.mubr.bf16.gmra.mrb[0].mxu0 %v125
  %v189 = vpop.f32.mrb[0].mxu0
  %v190 = vadd.f32 %v87, %v189
  %v191 = vpop.f32.mrb[0].mxu0
  %v192 = vpop.f32.mrb[0].mxu0
  %v193 = vadd.f32 %v92, %v192
  %v194 = vpop.f32.mrb[0].mxu0
  %195 = vdwg.mxu0
  %v196 = vmax.f32 %v166, 0.0
  %v197 = vmax.f32 %v169, 0.0
  %v198 = vmax.f32 %v174, 0.0
  %v199 = vmax.f32 %v177, 0.0
  %v200 = vmax.f32 %v182, 0.0
  %v201 = vmax.f32 %v185, 0.0
  %v202 = vmax.f32 %v190, 0.0
  %v203 = vmax.f32 %v193, 0.0
  %v204 = vpack.c.bf16 %v197, %v196
  %v205 = vpack.c.bf16 %v199, %v198
  %v206 = vpack.c.bf16 %v201, %v200
  %v207 = vpack.c.bf16 %v203, %v202
  %209 = vset.pattern.permute.xlu0 0
  %210 = vperm.xlu0 %209, %v48
  %v211 = vpop.permute.xlu0 %210
  %214 = vset.pattern.permute.xlu0 0
  %215 = vperm.xlu0 %214, %v49
  %v216 = vpop.permute.xlu0 %215
  %219 = vset.pattern.permute.xlu0 0
  %220 = vperm.xlu0 %219, %v50
  %v221 = vpop.permute.xlu0 %220
  %224 = vset.pattern.permute.xlu0 0
  %225 = vperm.xlu0 %224, %v51
  %v226 = vpop.permute.xlu0 %225
  %v232 = vunpack.c.l.b16 %v35
  %v233 = vunpack.c.l.b16 %v36
  %v234 = vunpack.c.l.b16 %v37
  %v235 = vunpack.c.l.b16 %v38
  %v236 = vpack.c.b16 %v233, %v232
  %v237 = vpack.c.b16 %v235, %v234
  %vm238 = vcmask 523264
  %v240 = vsel %vm238, %v236, 0
  %v243 = vsel %vm238, %v237, 0
  %245 = vmatprep.subr.bf16.mxu0 0
  %246 = vmatpush1.bf16.msra.mxu0 %v204
  %247 = vmatprep.subr.bf16.mxu0 0
  %248 = vmatpush1.bf16.msra.mxu0 %v205
  %249 = vmatprep.subr.bf16.mxu0 0
  %250 = vmatpush1.bf16.msra.mxu0 %v206
  %251 = vmatprep.subr.bf16.mxu0 0
  %252 = vmatpush1.bf16.msra.mxu0 %v207
  %253 = vmatprep.subr.bf16.mxu0 0
  %254 = vmatpush1.bf16.msra.mxu0 0
  %255 = vmatprep.subr.bf16.mxu0 0
  %256 = vmatpush1.bf16.msra.mxu0 0
  %257 = vmatprep.subr.bf16.mxu0 0
  %258 = vmatpush1.bf16.msra.mxu0 0
  %259 = vmatprep.subr.bf16.mxu0 0
  %260 = vmatpush1.bf16.msra.mxu0 0
  %261 = vmatprep.subr.bf16.mxu0 0
  %262 = vmatpush1.bf16.msra.mxu0 0
  %263 = vmatprep.subr.bf16.mxu0 0
  %264 = vmatpush1.bf16.msra.mxu0 0
  %265 = vmatprep.subr.bf16.mxu0 0
  %266 = vmatpush1.bf16.msra.mxu0 0
  %267 = vmatprep.subr.bf16.mxu0 0
  %268 = vmatpush1.bf16.msra.mxu0 0
  %269 = vmatprep.subr.bf16.mxu0 0
  %270 = vmatpush1.bf16.msra.mxu0 0
  %271 = vmatprep.subr.bf16.mxu0 0
  %272 = vmatpush1.bf16.msra.mxu0 0
  %273 = vmatprep.subr.bf16.mxu0 0
  %274 = vmatpush1.bf16.msra.mxu0 0
  %275 = vmatprep.subr.bf16.mxu0 0
  %276 = vmatpush1.bf16.msra.mxu0 0
  %277 = vmatprep.mubr.bf16.mxu0 0
  %278 = vmatmul.mubr.bf16.gmra.mrb[0].mxu0 %v240
  %v279 = vpop.f32.mrb[0].mxu0
  %v280 = vadd.f32 %v211, %v279
  %v281 = vpop.f32.mrb[0].mxu0
  %v282 = vpop.f32.mrb[0].mxu0
  %v283 = vadd.f32 %v216, %v282
  %v284 = vpop.f32.mrb[0].mxu0
  %285 = vmatprep.mubr.bf16.mxu0 0
  %286 = vmatmul.mubr.bf16.gmra.mrb[0].mxu0 %v243
  %v287 = vpop.f32.mrb[0].mxu0
  %v288 = vadd.f32 %v221, %v287
  %v289 = vpop.f32.mrb[0].mxu0
  %v290 = vpop.f32.mrb[0].mxu0
  %v291 = vadd.f32 %v226, %v290
  %v292 = vpop.f32.mrb[0].mxu0
  %293 = vdwg.mxu0
  %v294 = vmax.f32 %v280, 0.0
  %v295 = vmax.f32 %v283, 0.0
  %v296 = vmax.f32 %v288, 0.0
  %v297 = vmax.f32 %v291, 0.0
  %v298 = vpack.c.bf16 %v295, %v294
  %v299 = vpack.c.bf16 %v297, %v296
  %301 = vset.pattern.permute.xlu0 0
  %302 = vperm.xlu0 %301, %v52
  %v303 = vpop.permute.xlu0 %302
  %vm305 = vcmask 261120
  %v307 = vsel %vm305, %v39, 0
  %309 = vmatprep.subr.bf16.mxu0 0
  %310 = vmatpush1.bf16.msra.mxu0 %v298
  %311 = vmatprep.subr.bf16.mxu0 0
  %312 = vmatpush1.bf16.msra.mxu0 %v299
  %313 = vmatprep.subr.bf16.mxu0 0
  %314 = vmatpush1.bf16.msra.mxu0 0
  %315 = vmatprep.subr.bf16.mxu0 0
  %316 = vmatpush1.bf16.msra.mxu0 0
  %317 = vmatprep.subr.bf16.mxu0 0
  %318 = vmatpush1.bf16.msra.mxu0 0
  %319 = vmatprep.subr.bf16.mxu0 0
  %320 = vmatpush1.bf16.msra.mxu0 0
  %321 = vmatprep.subr.bf16.mxu0 0
  %322 = vmatpush1.bf16.msra.mxu0 0
  %323 = vmatprep.subr.bf16.mxu0 0
  %324 = vmatpush1.bf16.msra.mxu0 0
  %325 = vmatprep.subr.bf16.mxu0 0
  %326 = vmatpush1.bf16.msra.mxu0 0
  %327 = vmatprep.subr.bf16.mxu0 0
  %328 = vmatpush1.bf16.msra.mxu0 0
  %329 = vmatprep.subr.bf16.mxu0 0
  %330 = vmatpush1.bf16.msra.mxu0 0
  %331 = vmatprep.subr.bf16.mxu0 0
  %332 = vmatpush1.bf16.msra.mxu0 0
  %333 = vmatprep.subr.bf16.mxu0 0
  %334 = vmatpush1.bf16.msra.mxu0 0
  %335 = vmatprep.subr.bf16.mxu0 0
  %336 = vmatpush1.bf16.msra.mxu0 0
  %337 = vmatprep.subr.bf16.mxu0 0
  %338 = vmatpush1.bf16.msra.mxu0 0
  %339 = vmatprep.subr.bf16.mxu0 0
  %340 = vmatpush1.bf16.msra.mxu0 0
  %341 = vmatprep.mubr.bf16.mxu0 0
  %342 = vmatmul.mubr.bf16.gmra.mrb[0].mxu0 %v307
  %v343 = vpop.f32.mrb[0].mxu0
  %v344 = vadd.f32 %v303, %v343
  %v345 = vpop.f32.mrb[0].mxu0
  %v346 = vpop.f32.mrb[0].mxu0
  %v347 = vpop.f32.mrb[0].mxu0
  %348 = vdwg.mxu0
  %349 = vst [vmem:[%s7] sm:$0xf] %v344
  // Predicated region
  $region30: #{tpu_custom_call.1} parent=0 // pred_check
    _
  $region31: #{tpu_custom_call.1} parent=0 // pred_check_branch
    %351 = sbr.rel (0) target = $region33
  $region32: #{tpu_custom_call.1} parent=0 // pred_region
    _
  $region33: #{tpu_custom_call.1} parent=0 // pred_fallthru
    _
  // Predicated region
  $region34: #{tpu_custom_call.1} parent=0 // pred_check
    _
  $region35: #{tpu_custom_call.1} parent=0 // pred_check_branch
    %353 = sbr.rel (0) target = $region37
  $region36: #{tpu_custom_call.1} parent=0 // pred_region
    _
  $region37: #{tpu_custom_call.1} parent=0 // pred_fallthru
    _

</llo_original>
